<compile_context>
chip_gen: v7x
topology: tpu7x:2x2x1
jax: 0.10.0
libtpu: 0.0.40
codegen_flags: <defaults>
</compile_context>

<pallas_src>
import jax
import jax.numpy as jnp
from jax.experimental import pallas as pl
from jax.experimental.pallas import tpu as pltpu


# ----------------------------------------------------------------------------
# Pallas kernel: one batch element per grid step, block = x[n] in its native
# (C, T, H*W) layout.  No transposes inside or outside the kernel.
# ----------------------------------------------------------------------------
def nl_time_kernel(x_ref, o_ref):
    C, T, HW = x_ref.shape
    x = x_ref[...]                                               # (C, T, HW), native dtype

    # f[i, j] = sum_{c, m} x[c, i, m] * x[c, j, m]
    #   -> per-channel (T,HW)@(T,HW)^T batched over C on the MXU (contracting
    #      on the lane-dense last dim, no a.T relayout), then a cheap
    #      elementwise sum over the leading (major) channel axis.
    fc = jax.lax.dot_general(
        x, x,
        dimension_numbers=(((2,), (2,)), ((0,), (0,))),          # contract HW, batch C
        preferred_element_type=jnp.float32)                      # (C, T, T) f32
    f = jnp.sum(fc, axis=0)                                      # (T, T) f32

    # Row softmax over the key-time axis (f32, max-stabilized; recip on EUP).
    m = jnp.max(f, axis=-1, keepdims=True)
    p = jnp.exp(f - m)
    s = p * pl.reciprocal(jnp.sum(p, axis=-1, keepdims=True), approx=True)
    s = s.astype(x.dtype)                                        # keep bf16 MXU path if bf16 in

    # y[c, t, m] = sum_s S[t, s] * x[c, s, m]   (batched over C), + residual.
    sb = jnp.broadcast_to(s[None, :, :], (C, T, T))
    y = jax.lax.dot_general(
        sb, x,
        dimension_numbers=(((2,), (1,)), ((0,), (0,))),          # contract key-time, batch C
        preferred_element_type=jnp.float32)                      # (C, T, HW) f32
    # Residual add in f32, single cast back to the output dtype.
    o_ref[...] = (y + x.astype(jnp.float32)).astype(o_ref.dtype)


def nl_time_block(x):
    """x: (N, C, T, H, W) — same axis convention as the PyTorch module
    (mode='embedded', parametric=False, inter_channels == in_channels)."""
    N, C, T, H, W = x.shape
    HW = H * W
    # Free, contiguous reshape only (no transpose, no extra HBM pass).
    xr = x.reshape(N, C, T, HW)

    # Per-grid-step VMEM footprint: double-buffered in + out blocks + f32 temps.
    blk_bytes = C * T * HW * xr.dtype.itemsize
    est_bytes = 4 * blk_bytes + 2 * C * T * HW * 4 + 2 * C * T * T * 4
    vmem_limit = int(min(max(32 * 2**20, 2 * est_bytes), 64 * 2**20))
    # TODO(synk): for very large per-batch C*T*H*W (e.g. >~8 MiB blocks on v7x's
    # 64 MiB VMEM) add an HW-tiled two-pass variant (accumulate f over HW tiles,
    # softmax once, second pass for y) instead of whole-row blocks; and for very
    # small per-batch blocks with large N, pack several batch elements per step.

    out = pl.pallas_call(
        nl_time_kernel,
        out_shape=jax.ShapeDtypeStruct((N, C, T, HW), x.dtype),
        grid_spec=pltpu.PrefetchScalarGridSpec(
            num_scalar_prefetch=0,
            grid=(N,),
            in_specs=[pl.BlockSpec((None, C, T, HW), lambda b: (b, 0, 0, 0))],
            out_specs=pl.BlockSpec((None, C, T, HW), lambda b: (b, 0, 0, 0)),
        ),
        compiler_params=pltpu.CompilerParams(
            dimension_semantics=("parallel",),
            vmem_limit_bytes=vmem_limit),
    )(xr)

    # Output is already in NCTHW order — only a free reshape back.
    return out.reshape(N, C, T, H, W)


def init_unused_conv_params(key, in_channels, inter_channels):
    # The module's g / theta / phi 1x1x1 Conv3d params exist in __init__ but are
    # NOT applied in the forward when parametric=False (default). Initialized
    # here only for fidelity.
    ks = jax.random.split(key, 3)
    shape_w = (inter_channels, in_channels, 1, 1, 1)
    return {
        "g_w":     jax.random.normal(ks[0], shape_w, jnp.float32) * 0.02,
        "g_b":     jnp.zeros((inter_channels,), jnp.float32),
        "theta_w": jax.random.normal(ks[1], shape_w, jnp.float32) * 0.02,
        "theta_b": jnp.zeros((inter_channels,), jnp.float32),
        "phi_w":   jax.random.normal(ks[2], shape_w, jnp.float32) * 0.02,
        "phi_b":   jnp.zeros((inter_channels,), jnp.float32),
    }


def nl_time_block_ref(x):
    # Pure-JAX reference mirroring the PyTorch forward (embedded, non-parametric).
    N, C, T, H, W = x.shape
    M = C * H * W
    a = jnp.transpose(x, (0, 2, 1, 3, 4)).reshape(N, T, M)
    f = jnp.einsum("ntm,nsm->nts", a, a)
    s = jax.nn.softmax(f, axis=-1)
    y = jnp.einsum("nts,nsm->ntm", s, a)
    z = (y + a).reshape(N, T, C, H, W).transpose(0, 2, 1, 3, 4)
    return z


if __name__ == "__main__":
    key = jax.random.PRNGKey(0)
    k_x, k_p = jax.random.split(key)

    # Small shapes consistent with (N, C, T, H, W); in_channels == inter_channels.
    N, C, T, H, W = 2, 4, 8, 16, 16
    x = jax.random.normal(k_x, (N, C, T, H, W), jnp.float32)

    _ = init_unused_conv_params(k_p, in_channels=C, inter_channels=C)  # unused in forward

    z = nl_time_block(x)
    z = jax.block_until_ready(z)

    z_ref = nl_time_block_ref(x)
    assert z.shape == x.shape
    # Slightly relaxed tolerance: approx (EUP) reciprocal in the softmax denom.
    assert jnp.allclose(z, z_ref, atol=2e-3, rtol=2e-3), "mismatch vs reference"

    print("KERNEL_OK")
</pallas_src>

<mosaic_0001>
module attributes {stable_mosaic.version = 11 : i64} {
  func.func @nl_time_kernel(%arg0: i32, %arg1: memref<1x4x8x256xf32, #tpu.memory_space<vmem>>, %arg2: memref<1x4x8x256xf32, #tpu.memory_space<vmem>>) attributes {dimension_semantics = [#tpu.dimension_semantics<parallel>], iteration_bounds = array<i64: 2>, scalar_prefetch = 0 : i64, scratch_operands = 0 : i64, tpu.core_type = #tpu.core_type<tc>, window_params = [{transform_indices = @transform_0, window_bounds = array<i64: 1, 4, 8, 256>}, {transform_indices = @transform_1, window_bounds = array<i64: 1, 4, 8, 256>}]} {
    %c0 = arith.constant 0 : index
    %c0_0 = arith.constant 0 : index
    %c0_1 = arith.constant 0 : index
    %c0_2 = arith.constant 0 : index
    %0 = vector.load %arg1[%c0, %c0_0, %c0_1, %c0_2] : memref<1x4x8x256xf32, #tpu.memory_space<vmem>>, vector<1x4x8x256xf32>
    %1 = vector.shape_cast %0 : vector<1x4x8x256xf32> to vector<4x8x256xf32>
    %cst = arith.constant dense<0.000000e+00> : vector<4x8x8xf32>
    %2 = tpu.matmul %1, %1, %cst {dimension_numbers = #tpu.dot_dimension_numbers<[2], [2], [1], [1], [0, 0, 0, 1, 1, 1], [0], [0]>} : vector<4x8x256xf32>, vector<4x8x256xf32>, vector<4x8x8xf32> -> vector<4x8x8xf32>
    %cst_3 = arith.constant dense<0.000000e+00> : vector<8x8xf32>
    %3 = vector.multi_reduction <add>, %2, %cst_3 [0] : vector<4x8x8xf32> to vector<8x8xf32>
    %cst_4 = arith.constant dense<0xFF800000> : vector<8xf32>
    %4 = vector.multi_reduction <maximumf>, %3, %cst_4 [1] : vector<8x8xf32> to vector<8xf32>
    %5 = vector.shape_cast %4 : vector<8xf32> to vector<8x1xf32>
    %6 = vector.broadcast %5 : vector<8x1xf32> to vector<8x8xf32>
    %7 = arith.subf %3, %6 : vector<8x8xf32>
    %8 = math.exp %7 : vector<8x8xf32>
    %cst_5 = arith.constant dense<0.000000e+00> : vector<8xf32>
    %9 = vector.multi_reduction <add>, %8, %cst_5 [1] : vector<8x8xf32> to vector<8xf32>
    %10 = vector.shape_cast %9 : vector<8xf32> to vector<8x1xf32>
    %11 = tpu.reciprocal %10 {approx = true} : vector<8x1xf32> -> vector<8x1xf32>
    %12 = vector.broadcast %11 : vector<8x1xf32> to vector<8x8xf32>
    %13 = arith.mulf %8, %12 : vector<8x8xf32>
    %14 = vector.shape_cast %13 : vector<8x8xf32> to vector<1x8x8xf32>
    %15 = vector.shape_cast %14 : vector<1x8x8xf32> to vector<1x8x8xf32>
    %16 = vector.broadcast %15 : vector<1x8x8xf32> to vector<4x8x8xf32>
    %cst_6 = arith.constant dense<0.000000e+00> : vector<4x8x256xf32>
    %17 = tpu.matmul %16, %1, %cst_6 {dimension_numbers = #tpu.dot_dimension_numbers<[2], [1], [1], [2], [0, 0, 0, 1, 1, 2], [0], [0]>} : vector<4x8x8xf32>, vector<4x8x256xf32>, vector<4x8x256xf32> -> vector<4x8x256xf32>
    %18 = arith.addf %17, %1 : vector<4x8x256xf32>
    %c0_7 = arith.constant 0 : index
    %c0_8 = arith.constant 0 : index
    %c0_9 = arith.constant 0 : index
    %c0_10 = arith.constant 0 : index
    %19 = vector.load %arg2[%c0_7, %c0_8, %c0_9, %c0_10] : memref<1x4x8x256xf32, #tpu.memory_space<vmem>>, vector<1x4x8x256xf32>
    %20 = vector.shape_cast %19 : vector<1x4x8x256xf32> to vector<4x8x256xf32>
    %21 = vector.shape_cast %18 : vector<4x8x256xf32> to vector<1x4x8x256xf32>
    tpu.vector_store %arg2[%c0_7, %c0_8, %c0_9, %c0_10], %21 {strides = array<i32>} : memref<1x4x8x256xf32, #tpu.memory_space<vmem>>, vector<1x4x8x256xf32>,
    return
  }
  func.func @transform_0(%arg0: i32) -> (i32, i32, i32, i32) {
    %c0_i32 = arith.constant 0 : i32
    %c0_i32_0 = arith.constant 0 : i32
    %c0_i32_1 = arith.constant 0 : i32
    %c0_i32_2 = arith.constant 0 : i32
    return %arg0, %c0_i32, %c0_i32_0, %c0_i32_1 : i32, i32, i32, i32
  }
  func.func @transform_1(%arg0: i32) -> (i32, i32, i32, i32) {
    %c0_i32 = arith.constant 0 : i32
    %c0_i32_0 = arith.constant 0 : i32
    %c0_i32_1 = arith.constant 0 : i32
    %c0_i32_2 = arith.constant 0 : i32
    return %arg0, %c0_i32, %c0_i32_0, %c0_i32_1 : i32, i32, i32, i32
  }
}

</mosaic_0001>

<llo_original>
// kernel: tpu_custom_call.1
$region0: #{tpu_custom_call.1}
  #allocation0 [shape = 'u32[]', space=smem, size = 0x4, offset = 0x4, fixed_abs, tag = 'smem constant byte address 0x4 - core index']
  #allocation1 [shape = 'u32[144,128]{1,0:T(1,128)}', space=vmem, size = 0x12000, scoped, tag = 'internal scratch']
  %s0 = inlined_call_operand.hbm [shape: f32[2,4,8,256], index: 0, kind: input, shape index: {}]
  %s1 = inlined_call_operand.hbm [shape: f32[2,4,8,256], index: 1, kind: output, shape index: {}]
  %s2 = sld [smem:[#allocation0]]
  $region41: #{tpu_custom_call.1} parent=0
    _
  %s4 = ssub.s32 1, %s2
  %s5 = scalar_select 0, %s4, %s2
  $region1: #{tpu_custom_call.1} parent=0
    #allocation2 [shape = 'u8[65536]{0}', space=vmem, size = 0x10000, scoped, tag = 'input window, operand 0']
    #allocation3 [shape = 's32[2]{0}', space=sflag, size = 0x8, scoped, tag = 'scoped memory for tpu_custom_call.1']
    #allocation4 [shape = 's32[2]{0}', space=sflag, size = 0x8, scoped, tag = 'scoped memory for tpu_custom_call.1']
    #allocation5 [shape = 'u8[65536]{0}', space=vmem, size = 0x10000, scoped, tag = 'output window, operand 0']
    %6 = vsyncpa [#allocation3], 0
    %s7 = scalar_lea.sflag [#allocation3], 1
    %8 = vsyncpa %s7, 0
    %9 = vsyncpa [#allocation4], 0
    %s10 = scalar_lea.sflag [#allocation4], 1
    %11 = vsyncpa %s10, 0
    loop: start=0, step=1, limit=4
    $region2: #{tpu_custom_call.1} parent=1 // loop_pre_header
      _
    $region3: #{tpu_custom_call.1} parent=1 // loop_header
      %s13 = sphi 0, %s17
      %p14 = scmp.ge.s32.totalorder %s13, 4
      %s23 = sphi 0, %s25
      %s26 = sphi 0, %s23
      %s27 = sphi 0, %s26
      %s43 = sphi 0, %s27
      %s49 = sphi 0, %s51
      %s52 = sphi 0, %s49
      %s53 = sphi 0, %s52
      %s69 = sphi 0, %s53
    $region4: #{tpu_custom_call.1} parent=1 // loop_header_branch
      %16 = sbr.rel (%p14) target = $region8
    $region5: #{tpu_custom_call.1} parent=1 // loop_body
      %s18 = ssub.s32 %s13, 1
      %s19 = ssub.s32 %s13, 2
      %s20 = sadd.s32 %s13, 1
      %s21 = ssub.s32 %s13, %s20
      %p22 = scmp.eq.s32.totalorder %s21, 0
      %s24 = sadd.s32 %s23, 1
      %s25 = scalar_select %p22, %s23, %s24
      %p28 = pneg %p22
      %p29 = scmp.eq.s32.totalorder %s13, 1
      %p30 = por %p28, %p29
      %p31 = scmp.ne.s32.totalorder %s23, %s26
      %p32 = scmp.eq.s32.totalorder %s13, 0
      %p33 = por %p31, %p32
      %p34 = scmp.ne.s32.totalorder %s23, %s26
      %p35 = scmp.eq.s32.totalorder %s18, 1
      %p36 = por %p34, %p35
      %p37 = scmp.ne.s32.totalorder %s26, %s27
      %p38 = scmp.eq.s32.totalorder %s18, 0
      %p39 = por %p37, %p38
      %p40 = scmp.ne.s32.totalorder %s26, %s27
      %p41 = scmp.eq.s32.totalorder %s19, 1
      %p42 = por %p40, %p41
      %p44 = scmp.ne.s32.totalorder %s27, %s43
      %p45 = scmp.eq.s32.totalorder %s19, 0
      %p46 = por %p44, %p45
      %s47 = ssub.s32 %s13, %s20
      %p48 = scmp.eq.s32.totalorder %s47, 0
      %s50 = sadd.s32 %s49, 1
      %s51 = scalar_select %p48, %s49, %s50
      %p54 = pneg %p48
      %p55 = scmp.eq.s32.totalorder %s13, 1
      %p56 = por %p54, %p55
      %p57 = scmp.ne.s32.totalorder %s49, %s52
      %p58 = scmp.eq.s32.totalorder %s13, 0
      %p59 = por %p57, %p58
      %p60 = scmp.ne.s32.totalorder %s49, %s52
      %p61 = scmp.eq.s32.totalorder %s18, 1
      %p62 = por %p60, %p61
      %p63 = scmp.ne.s32.totalorder %s52, %s53
      %p64 = scmp.eq.s32.totalorder %s18, 0
      %p65 = por %p63, %p64
      %p66 = scmp.ne.s32.totalorder %s52, %s53
      %p67 = scmp.eq.s32.totalorder %s19, 1
      %p68 = por %p66, %p67
      %p70 = scmp.ne.s32.totalorder %s53, %s69
      %p71 = scmp.eq.s32.totalorder %s19, 0
      %p72 = por %p70, %p71
      %p73 = scmp.le.s32.totalorder 1, %s13
      %p74 = scmp.lt.s32.totalorder %s13, 3
      %p75 = pnand %p73, %p74
      %p76 = pneg %p75
      // Predicated region
      $region9: #{tpu_custom_call.1} parent=5 // pred_check
        _
      $region10: #{tpu_custom_call.1} parent=5 // pred_check_branch
        %78 = sbr.rel (%p75) target = $region12
      $region11: #{tpu_custom_call.1} parent=5 // pred_region
        %s79 = ssub.s32 %s13, 1
      $region12: #{tpu_custom_call.1} parent=5 // pred_fallthru
        _
      %p80 = scmp.lt.s32.totalorder %s13, 2
      // Predicated region
      $region13: #{tpu_custom_call.1} parent=5 // pred_check
        %p81 = pneg %p80
      $region14: #{tpu_custom_call.1} parent=5 // pred_check_branch
        %83 = sbr.rel (%p81) target = $region16
      $region15: #{tpu_custom_call.1} parent=5 // pred_region
        // Predicated region
        $region17: #{tpu_custom_call.1} parent=15 // pred_check
          %p84 = pneg %p33
        $region18: #{tpu_custom_call.1} parent=15 // pred_check_branch
          %86 = sbr.rel (%p84) target = $region20
        $region19: #{tpu_custom_call.1} parent=15 // pred_region
          %s87 = sand.u32 %s23, 1
          %s88 = scalar_lea.sflag [#allocation3], %s87
          %s89 = sand.u32 %s23, 1
          %s90 = smul.addr %s89, 64
          %s91 = scalar_lea.vmem [#allocation2], %s90
          %s93 = ssub.s32 1024, 1024
          %94 = vsyncadd %s88, %s93
          %s95 = smul.addr %s13, 8
          %s96 = smul.addr %s95, 128
          %s97 = scalar_lea.hbm %s0, %s96
          %s98 = sshll.u32 %s91, 4
          %s99 = int_to_ptr.vmem [resolvable:$true] %s98
          %104 = dma.hbm_to_vmem [thread:$0]  %s97, 1024, %s99, %s88, 256, 256, 16
        $region20: #{tpu_custom_call.1} parent=15 // pred_fallthru
          _
      $region16: #{tpu_custom_call.1} parent=5 // pred_fallthru
        _
      %p105 = scmp.le.s32.totalorder 1, %s13
      %p106 = scmp.lt.s32.totalorder %s13, 3
      %p107 = pnand %p105, %p106
      %p108 = pneg %p107
      // Predicated region
      $region21: #{tpu_custom_call.1} parent=5 // pred_check
        _
      $region22: #{tpu_custom_call.1} parent=5 // pred_check_branch
        %110 = sbr.rel (%p107) target = $region24
      $region23: #{tpu_custom_call.1} parent=5 // pred_region
        %s111 = ssub.s32 %s13, 1
        %s112 = sand.u32 %s26, 1
        %s113 = scalar_lea.sflag [#allocation3], %s112
        %s114 = sand.u32 %s26, 1
        %s115 = smul.addr %s114, 64
        %s116 = scalar_lea.vmem [#allocation2], %s115
        // Predicated region
        $region25: #{tpu_custom_call.1} parent=23 // pred_check
          %p117 = pneg %p39
        $region26: #{tpu_custom_call.1} parent=23 // pred_check_branch
          %119 = sbr.rel (%p117) target = $region28
        $region27: #{tpu_custom_call.1} parent=23 // pred_region
          %120 = dma.done %s113, 1024
        $region28: #{tpu_custom_call.1} parent=23 // pred_fallthru
          _
        %s121 = sand.u32 %s26, 1
        %s122 = scalar_lea.sflag [#allocation3], %s121
        %s123 = sand.u32 %s26, 1
        %s124 = smul.addr %s123, 64
        %s125 = scalar_lea.vmem [#allocation2], %s124
        %p126 = pneg %p39
        %p127 = pneg %p36
        %p128 = pneg %p65
        %p129 = pneg %p62
        %s130 = sand.u32 %s52, 1
        %s131 = scalar_lea.sflag [#allocation4], %s130
        %s132 = sand.u32 %s52, 1
        %s133 = smul.addr %s132, 64
        %s134 = scalar_lea.vmem [#allocation5], %s133
        %v135 = vld [vmem:[%s116] sm:$0xff]
        %v136 = vld [vmem:[%s116 + $0x8] sm:$0xff]
        %v137 = vld [vmem:[%s116 + $0x10] sm:$0xff]
        %v138 = vld [vmem:[%s116 + $0x18] sm:$0xff]
        %v139 = vld [vmem:[%s116 + $0x20] sm:$0xff]
        %v140 = vld [vmem:[%s116 + $0x28] sm:$0xff]
        %v141 = vld [vmem:[%s116 + $0x30] sm:$0xff]
        %v142 = vld [vmem:[%s116 + $0x38] sm:$0xff]
        %143 = vmatprep.subr.mxu0 %v136
        %144 = vmatpush1.xpose.msra.mxu0 %v135
        %145 = vmatprep.subr.mxu0 0.0
        %146 = vmatpush1.xpose.msra.mxu0 0.0
        %147 = vmatprep.subr.mxu0 0.0
        %148 = vmatpush1.xpose.msra.mxu0 0.0
        %149 = vmatprep.subr.mxu0 0.0
        %150 = vmatpush1.xpose.msra.mxu0 0.0
        %151 = vmatprep.subr.mxu0 0.0
        %152 = vmatpush1.xpose.msra.mxu0 0.0
        %153 = vmatprep.subr.mxu0 0.0
        %154 = vmatpush1.xpose.msra.mxu0 0.0
        %155 = vmatprep.subr.mxu0 0.0
        %156 = vmatpush1.xpose.msra.mxu0 0.0
        %157 = vmatprep.subr.mxu0 0.0
        %158 = vmatpush1.xpose.msra.mxu0 0.0
        %159 = vmatprep.subr.mxu0 0.0
        %160 = vmatpush1.xpose.msra.mxu0 0.0
        %161 = vmatprep.subr.mxu0 0.0
        %162 = vmatpush1.xpose.msra.mxu0 0.0
        %163 = vmatprep.subr.mxu0 0.0
        %164 = vmatpush1.xpose.msra.mxu0 0.0
        %165 = vmatprep.subr.mxu0 0.0
        %166 = vmatpush1.xpose.msra.mxu0 0.0
        %167 = vmatprep.subr.mxu0 0.0
        %168 = vmatpush1.xpose.msra.mxu0 0.0
        %169 = vmatprep.subr.mxu0 0.0
        %170 = vmatpush1.xpose.msra.mxu0 0.0
        %171 = vmatprep.subr.mxu0 0.0
        %172 = vmatpush1.xpose.msra.mxu0 0.0
        %173 = vmatprep.subr.mxu0 0.0
        %174 = vmatpush1.xpose.msra.mxu0 0.0
        %175 = vmatprep.subr.mxu0 0.0
        %176 = vmatpush1.xpose.msra.mxu0 0.0
        %177 = vmatprep.subr.mxu0 0.0
        %178 = vmatpush1.xpose.msra.mxu0 0.0
        %179 = vmatprep.subr.mxu0 0.0
        %180 = vmatpush1.xpose.msra.mxu0 0.0
        %181 = vmatprep.subr.mxu0 0.0
        %182 = vmatpush1.xpose.msra.mxu0 0.0
        %183 = vmatprep.subr.mxu0 0.0
        %184 = vmatpush1.xpose.msra.mxu0 0.0
        %185 = vmatprep.subr.mxu0 0.0
        %186 = vmatpush1.xpose.msra.mxu0 0.0
        %187 = vmatprep.subr.mxu0 0.0
        %188 = vmatpush1.xpose.msra.mxu0 0.0
        %189 = vmatprep.subr.mxu0 0.0
        %190 = vmatpush1.xpose.msra.mxu0 0.0
        %191 = vmatprep.subr.mxu0 0.0
        %192 = vmatpush1.xpose.msra.mxu0 0.0
        %193 = vmatprep.subr.mxu0 0.0
        %194 = vmatpush1.xpose.msra.mxu0 0.0
        %195 = vmatprep.subr.mxu0 0.0
        %196 = vmatpush1.xpose.msra.mxu0 0.0
        %197 = vmatprep.subr.mxu0 0.0
        %198 = vmatpush1.xpose.msra.mxu0 0.0
        %199 = vmatprep.subr.mxu0 0.0
        %200 = vmatpush1.xpose.msra.mxu0 0.0
        %201 = vmatprep.subr.mxu0 0.0
        %202 = vmatpush1.xpose.msra.mxu0 0.0
        %203 = vmatprep.subr.mxu0 0.0
        %204 = vmatpush1.xpose.msra.mxu0 0.0
        %205 = vmatprep.subr.mxu0 0.0
        %206 = vmatpush1.xpose.msra.mxu0 0.0
        %207 = vmatprep.mubr.f32.mxu0 %v136
        %208 = vmatmul.mubr.f32.gmra.mrb[0].mxu0 %v135
        %v209 = vpop.f32.mrb[0].mxu0
        %v210 = vadd.f32 0.0, %v209
        %v211 = vpop.f32.mrb[0].mxu0
        %212 = vdwg.mxu0
        %213 = vmatprep.subr.mxu0 %v138
        %214 = vmatpush1.xpose.msra.mxu0 %v137
        %215 = vmatprep.subr.mxu0 0.0
        %216 = vmatpush1.xpose.msra.mxu0 0.0
        %217 = vmatprep.subr.mxu0 0.0
        %218 = vmatpush1.xpose.msra.mxu0 0.0
        %219 = vmatprep.subr.mxu0 0.0
        %220 = vmatpush1.xpose.msra.mxu0 0.0
        %221 = vmatprep.subr.mxu0 0.0
        %222 = vmatpush1.xpose.msra.mxu0 0.0
        %223 = vmatprep.subr.mxu0 0.0
        %224 = vmatpush1.xpose.msra.mxu0 0.0
        %225 = vmatprep.subr.mxu0 0.0
        %226 = vmatpush1.xpose.msra.mxu0 0.0
        %227 = vmatprep.subr.mxu0 0.0
        %228 = vmatpush1.xpose.msra.mxu0 0.0
        %229 = vmatprep.subr.mxu0 0.0
        %230 = vmatpush1.xpose.msra.mxu0 0.0
        %231 = vmatprep.subr.mxu0 0.0
        %232 = vmatpush1.xpose.msra.mxu0 0.0
        %233 = vmatprep.subr.mxu0 0.0
        %234 = vmatpush1.xpose.msra.mxu0 0.0
        %235 = vmatprep.subr.mxu0 0.0
        %236 = vmatpush1.xpose.msra.mxu0 0.0
        %237 = vmatprep.subr.mxu0 0.0
        %238 = vmatpush1.xpose.msra.mxu0 0.0
        %239 = vmatprep.subr.mxu0 0.0
        %240 = vmatpush1.xpose.msra.mxu0 0.0
        %241 = vmatprep.subr.mxu0 0.0
        %242 = vmatpush1.xpose.msra.mxu0 0.0
        %243 = vmatprep.subr.mxu0 0.0
        %244 = vmatpush1.xpose.msra.mxu0 0.0
        %245 = vmatprep.subr.mxu0 0.0
        %246 = vmatpush1.xpose.msra.mxu0 0.0
        %247 = vmatprep.subr.mxu0 0.0
        %248 = vmatpush1.xpose.msra.mxu0 0.0
        %249 = vmatprep.subr.mxu0 0.0
        %250 = vmatpush1.xpose.msra.mxu0 0.0
        %251 = vmatprep.subr.mxu0 0.0
        %252 = vmatpush1.xpose.msra.mxu0 0.0
        %253 = vmatprep.subr.mxu0 0.0
        %254 = vmatpush1.xpose.msra.mxu0 0.0
        %255 = vmatprep.subr.mxu0 0.0
        %256 = vmatpush1.xpose.msra.mxu0 0.0
        %257 = vmatprep.subr.mxu0 0.0
        %258 = vmatpush1.xpose.msra.mxu0 0.0
        %259 = vmatprep.subr.mxu0 0.0
        %260 = vmatpush1.xpose.msra.mxu0 0.0
        %261 = vmatprep.subr.mxu0 0.0
        %262 = vmatpush1.xpose.msra.mxu0 0.0
        %263 = vmatprep.subr.mxu0 0.0
        %264 = vmatpush1.xpose.msra.mxu0 0.0
        %265 = vmatprep.subr.mxu0 0.0
        %266 = vmatpush1.xpose.msra.mxu0 0.0
        %267 = vmatprep.subr.mxu0 0.0
        %268 = vmatpush1.xpose.msra.mxu0 0.0
        %269 = vmatprep.subr.mxu0 0.0
        %270 = vmatpush1.xpose.msra.mxu0 0.0
        %271 = vmatprep.subr.mxu0 0.0
        %272 = vmatpush1.xpose.msra.mxu0 0.0
        %273 = vmatprep.subr.mxu0 0.0
        %274 = vmatpush1.xpose.msra.mxu0 0.0
        %275 = vmatprep.subr.mxu0 0.0
        %276 = vmatpush1.xpose.msra.mxu0 0.0
        %277 = vmatprep.mubr.f32.mxu0 %v138
        %278 = vmatmul.mubr.f32.gmra.mrb[0].mxu0 %v137
        %v279 = vpop.f32.mrb[0].mxu0
        %v280 = vadd.f32 0.0, %v279
        %v281 = vpop.f32.mrb[0].mxu0
        %282 = vdwg.mxu0
        %283 = vmatprep.subr.mxu0 %v140
        %284 = vmatpush1.xpose.msra.mxu0 %v139
        %285 = vmatprep.subr.mxu0 0.0
        %286 = vmatpush1.xpose.msra.mxu0 0.0
        %287 = vmatprep.subr.mxu0 0.0
        %288 = vmatpush1.xpose.msra.mxu0 0.0
        %289 = vmatprep.subr.mxu0 0.0
        %290 = vmatpush1.xpose.msra.mxu0 0.0
        %291 = vmatprep.subr.mxu0 0.0
        %292 = vmatpush1.xpose.msra.mxu0 0.0
        %293 = vmatprep.subr.mxu0 0.0
        %294 = vmatpush1.xpose.msra.mxu0 0.0
        %295 = vmatprep.subr.mxu0 0.0
        %296 = vmatpush1.xpose.msra.mxu0 0.0
        %297 = vmatprep.subr.mxu0 0.0
        %298 = vmatpush1.xpose.msra.mxu0 0.0
        %299 = vmatprep.subr.mxu0 0.0
        %300 = vmatpush1.xpose.msra.mxu0 0.0
        %301 = vmatprep.subr.mxu0 0.0
        %302 = vmatpush1.xpose.msra.mxu0 0.0
        %303 = vmatprep.subr.mxu0 0.0
        %304 = vmatpush1.xpose.msra.mxu0 0.0
        %305 = vmatprep.subr.mxu0 0.0
        %306 = vmatpush1.xpose.msra.mxu0 0.0
        %307 = vmatprep.subr.mxu0 0.0
        %308 = vmatpush1.xpose.msra.mxu0 0.0
        %309 = vmatprep.subr.mxu0 0.0
        %310 = vmatpush1.xpose.msra.mxu0 0.0
        %311 = vmatprep.subr.mxu0 0.0
        %312 = vmatpush1.xpose.msra.mxu0 0.0
        %313 = vmatprep.subr.mxu0 0.0
        %314 = vmatpush1.xpose.msra.mxu0 0.0
        %315 = vmatprep.subr.mxu0 0.0
        %316 = vmatpush1.xpose.msra.mxu0 0.0
        %317 = vmatprep.subr.mxu0 0.0
        %318 = vmatpush1.xpose.msra.mxu0 0.0
        %319 = vmatprep.subr.mxu0 0.0
        %320 = vmatpush1.xpose.msra.mxu0 0.0
        %321 = vmatprep.subr.mxu0 0.0
        %322 = vmatpush1.xpose.msra.mxu0 0.0
        %323 = vmatprep.subr.mxu0 0.0
        %324 = vmatpush1.xpose.msra.mxu0 0.0
        %325 = vmatprep.subr.mxu0 0.0
        %326 = vmatpush1.xpose.msra.mxu0 0.0
        %327 = vmatprep.subr.mxu0 0.0
        %328 = vmatpush1.xpose.msra.mxu0 0.0
        %329 = vmatprep.subr.mxu0 0.0
        %330 = vmatpush1.xpose.msra.mxu0 0.0
        %331 = vmatprep.subr.mxu0 0.0
        %332 = vmatpush1.xpose.msra.mxu0 0.0
        %333 = vmatprep.subr.mxu0 0.0
        %334 = vmatpush1.xpose.msra.mxu0 0.0
        %335 = vmatprep.subr.mxu0 0.0
        %336 = vmatpush1.xpose.msra.mxu0 0.0
        %337 = vmatprep.subr.mxu0 0.0
        %338 = vmatpush1.xpose.msra.mxu0 0.0
        %339 = vmatprep.subr.mxu0 0.0
        %340 = vmatpush1.xpose.msra.mxu0 0.0
        %341 = vmatprep.subr.mxu0 0.0
        %342 = vmatpush1.xpose.msra.mxu0 0.0
        %343 = vmatprep.subr.mxu0 0.0
        %344 = vmatpush1.xpose.msra.mxu0 0.0
        %345 = vmatprep.subr.mxu0 0.0
        %346 = vmatpush1.xpose.msra.mxu0 0.0
        %347 = vmatprep.mubr.f32.mxu0 %v140
        %348 = vmatmul.mubr.f32.gmra.mrb[0].mxu0 %v139
        %v349 = vpop.f32.mrb[0].mxu0
        %v350 = vadd.f32 0.0, %v349
        %v351 = vpop.f32.mrb[0].mxu0
        %352 = vdwg.mxu0
        %353 = vmatprep.subr.mxu0 %v142
        %354 = vmatpush1.xpose.msra.mxu0 %v141
        %355 = vmatprep.subr.mxu0 0.0
        %356 = vmatpush1.xpose.msra.mxu0 0.0
        %357 = vmatprep.subr.mxu0 0.0
        %358 = vmatpush1.xpose.msra.mxu0 0.0
        %359 = vmatprep.subr.mxu0 0.0
        %360 = vmatpush1.xpose.msra.mxu0 0.0
        %361 = vmatprep.subr.mxu0 0.0
        %362 = vmatpush1.xpose.msra.mxu0 0.0
        %363 = vmatprep.subr.mxu0 0.0
        %364 = vmatpush1.xpose.msra.mxu0 0.0
        %365 = vmatprep.subr.mxu0 0.0
        %366 = vmatpush1.xpose.msra.mxu0 0.0
        %367 = vmatprep.subr.mxu0 0.0
        %368 = vmatpush1.xpose.msra.mxu0 0.0
        %369 = vmatprep.subr.mxu0 0.0
        %370 = vmatpush1.xpose.msra.mxu0 0.0
        %371 = vmatprep.subr.mxu0 0.0
        %372 = vmatpush1.xpose.msra.mxu0 0.0
        %373 = vmatprep.subr.mxu0 0.0
        %374 = vmatpush1.xpose.msra.mxu0 0.0
        %375 = vmatprep.subr.mxu0 0.0
        %376 = vmatpush1.xpose.msra.mxu0 0.0
        %377 = vmatprep.subr.mxu0 0.0
        %378 = vmatpush1.xpose.msra.mxu0 0.0
        %379 = vmatprep.subr.mxu0 0.0
        %380 = vmatpush1.xpose.msra.mxu0 0.0
        %381 = vmatprep.subr.mxu0 0.0
        %382 = vmatpush1.xpose.msra.mxu0 0.0
        %383 = vmatprep.subr.mxu0 0.0
        %384 = vmatpush1.xpose.msra.mxu0 0.0
        %385 = vmatprep.subr.mxu0 0.0
        %386 = vmatpush1.xpose.msra.mxu0 0.0
        %387 = vmatprep.subr.mxu0 0.0
        %388 = vmatpush1.xpose.msra.mxu0 0.0
        %389 = vmatprep.subr.mxu0 0.0
        %390 = vmatpush1.xpose.msra.mxu0 0.0
        %391 = vmatprep.subr.mxu0 0.0
        %392 = vmatpush1.xpose.msra.mxu0 0.0
        %393 = vmatprep.subr.mxu0 0.0
        %394 = vmatpush1.xpose.msra.mxu0 0.0
        %395 = vmatprep.subr.mxu0 0.0
        %396 = vmatpush1.xpose.msra.mxu0 0.0
        %397 = vmatprep.subr.mxu0 0.0
        %398 = vmatpush1.xpose.msra.mxu0 0.0
        %399 = vmatprep.subr.mxu0 0.0
        %400 = vmatpush1.xpose.msra.mxu0 0.0
        %401 = vmatprep.subr.mxu0 0.0
        %402 = vmatpush1.xpose.msra.mxu0 0.0
        %403 = vmatprep.subr.mxu0 0.0
        %404 = vmatpush1.xpose.msra.mxu0 0.0
        %405 = vmatprep.subr.mxu0 0.0
        %406 = vmatpush1.xpose.msra.mxu0 0.0
        %407 = vmatprep.subr.mxu0 0.0
        %408 = vmatpush1.xpose.msra.mxu0 0.0
        %409 = vmatprep.subr.mxu0 0.0
        %410 = vmatpush1.xpose.msra.mxu0 0.0
        %411 = vmatprep.subr.mxu0 0.0
        %412 = vmatpush1.xpose.msra.mxu0 0.0
        %413 = vmatprep.subr.mxu0 0.0
        %414 = vmatpush1.xpose.msra.mxu0 0.0
        %415 = vmatprep.subr.mxu0 0.0
        %416 = vmatpush1.xpose.msra.mxu0 0.0
        %417 = vmatprep.mubr.f32.mxu0 %v142
        %418 = vmatmul.mubr.f32.gmra.mrb[0].mxu0 %v141
        %v419 = vpop.f32.mrb[0].mxu0
        %v420 = vadd.f32 0.0, %v419
        %v421 = vpop.f32.mrb[0].mxu0
        %422 = vdwg.mxu0
        %vm423 = vcmask 64512
        %v424 = vsel %vm423, %v210, 0.0
        %v425 = vsel %vm423, %v280, 0.0
        %v426 = vadd.f32 %v424, %v425
        %v427 = vsel %vm423, %v350, 0.0
        %v428 = vadd.f32 %v426, %v427
        %v429 = vsel %vm423, %v420, 0.0
        %v430 = vadd.f32 %v428, %v429
        %v431 = vsel %vm423, %v430, -inf
        %432 = vmax.xlane.f32.xlu0 %v431
        %v433 = vpop.xlane.xlu0 %432
        %v434 = vsub.f32 %v430, %v433
        %v435 = vmul.f32 %v434, 1.442695
        %v436 = vpow.pop %v435
        %v437 = vsel %vm423, %v436, 0.0
        %438 = vadd.xlane.f32.xlu0 %v437
        %v439 = vpop.xlane.xlu0 %438
        %v440 = vrcp.pop %v439
        %v441 = vmul.f32 %v436, %v440
        %v443 = vsel %vm423, %v441, 0
        %445 = vmatprep.subr.mxu0 %v136
        %446 = vmatpush1.msra.mxu0 %v135
        %447 = vmatprep.subr.mxu0 0.0
        %448 = vmatpush1.msra.mxu0 0.0
        %449 = vmatprep.subr.mxu0 0.0
        %450 = vmatpush1.msra.mxu0 0.0
        %451 = vmatprep.subr.mxu0 0.0
        %452 = vmatpush1.msra.mxu0 0.0
        %453 = vmatprep.subr.mxu0 0.0
        %454 = vmatpush1.msra.mxu0 0.0
        %455 = vmatprep.subr.mxu0 0.0
        %456 = vmatpush1.msra.mxu0 0.0
        %457 = vmatprep.subr.mxu0 0.0
        %458 = vmatpush1.msra.mxu0 0.0
        %459 = vmatprep.subr.mxu0 0.0
        %460 = vmatpush1.msra.mxu0 0.0
        %461 = vmatprep.subr.mxu0 0.0
        %462 = vmatpush1.msra.mxu0 0.0
        %463 = vmatprep.subr.mxu0 0.0
        %464 = vmatpush1.msra.mxu0 0.0
        %465 = vmatprep.subr.mxu0 0.0
        %466 = vmatpush1.msra.mxu0 0.0
        %467 = vmatprep.subr.mxu0 0.0
        %468 = vmatpush1.msra.mxu0 0.0
        %469 = vmatprep.subr.mxu0 0.0
        %470 = vmatpush1.msra.mxu0 0.0
        %471 = vmatprep.subr.mxu0 0.0
        %472 = vmatpush1.msra.mxu0 0.0
        %473 = vmatprep.subr.mxu0 0.0
        %474 = vmatpush1.msra.mxu0 0.0
        %475 = vmatprep.subr.mxu0 0.0
        %476 = vmatpush1.msra.mxu0 0.0
        %477 = vmatprep.subr.mxu0 0.0
        %478 = vmatpush1.msra.mxu0 0.0
        %479 = vmatprep.subr.mxu0 0.0
        %480 = vmatpush1.msra.mxu0 0.0
        %481 = vmatprep.subr.mxu0 0.0
        %482 = vmatpush1.msra.mxu0 0.0
        %483 = vmatprep.subr.mxu0 0.0
        %484 = vmatpush1.msra.mxu0 0.0
        %485 = vmatprep.subr.mxu0 0.0
        %486 = vmatpush1.msra.mxu0 0.0
        %487 = vmatprep.subr.mxu0 0.0
        %488 = vmatpush1.msra.mxu0 0.0
        %489 = vmatprep.subr.mxu0 0.0
        %490 = vmatpush1.msra.mxu0 0.0
        %491 = vmatprep.subr.mxu0 0.0
        %492 = vmatpush1.msra.mxu0 0.0
        %493 = vmatprep.subr.mxu0 0.0
        %494 = vmatpush1.msra.mxu0 0.0
        %495 = vmatprep.subr.mxu0 0.0
        %496 = vmatpush1.msra.mxu0 0.0
        %497 = vmatprep.subr.mxu0 0.0
        %498 = vmatpush1.msra.mxu0 0.0
        %499 = vmatprep.subr.mxu0 0.0
        %500 = vmatpush1.msra.mxu0 0.0
        %501 = vmatprep.subr.mxu0 0.0
        %502 = vmatpush1.msra.mxu0 0.0
        %503 = vmatprep.subr.mxu0 0.0
        %504 = vmatpush1.msra.mxu0 0.0
        %505 = vmatprep.subr.mxu0 0.0
        %506 = vmatpush1.msra.mxu0 0.0
        %507 = vmatprep.subr.mxu0 0.0
        %508 = vmatpush1.msra.mxu0 0.0
        %509 = vmatprep.mubr.f32.mxu0 0.0
        %510 = vmatmul.mubr.f32.gmra.mrb[0].mxu0 %v443
        %v511 = vpop.f32.mrb[0].mxu0
        %v512 = vadd.f32 %v135, %v511
        %v513 = vpop.f32.mrb[0].mxu0
        %v514 = vadd.f32 %v136, %v513
        %515 = vdwg.mxu0
        %516 = vmatprep.subr.mxu0 %v138
        %517 = vmatpush1.msra.mxu0 %v137
        %518 = vmatprep.subr.mxu0 0.0
        %519 = vmatpush1.msra.mxu0 0.0
        %520 = vmatprep.subr.mxu0 0.0
        %521 = vmatpush1.msra.mxu0 0.0
        %522 = vmatprep.subr.mxu0 0.0
        %523 = vmatpush1.msra.mxu0 0.0
        %524 = vmatprep.subr.mxu0 0.0
        %525 = vmatpush1.msra.mxu0 0.0
        %526 = vmatprep.subr.mxu0 0.0
        %527 = vmatpush1.msra.mxu0 0.0
        %528 = vmatprep.subr.mxu0 0.0
        %529 = vmatpush1.msra.mxu0 0.0
        %530 = vmatprep.subr.mxu0 0.0
        %531 = vmatpush1.msra.mxu0 0.0
        %532 = vmatprep.subr.mxu0 0.0
        %533 = vmatpush1.msra.mxu0 0.0
        %534 = vmatprep.subr.mxu0 0.0
        %535 = vmatpush1.msra.mxu0 0.0
        %536 = vmatprep.subr.mxu0 0.0
        %537 = vmatpush1.msra.mxu0 0.0
        %538 = vmatprep.subr.mxu0 0.0
        %539 = vmatpush1.msra.mxu0 0.0
        %540 = vmatprep.subr.mxu0 0.0
        %541 = vmatpush1.msra.mxu0 0.0
        %542 = vmatprep.subr.mxu0 0.0
        %543 = vmatpush1.msra.mxu0 0.0
        %544 = vmatprep.subr.mxu0 0.0
        %545 = vmatpush1.msra.mxu0 0.0
        %546 = vmatprep.subr.mxu0 0.0
        %547 = vmatpush1.msra.mxu0 0.0
        %548 = vmatprep.subr.mxu0 0.0
        %549 = vmatpush1.msra.mxu0 0.0
        %550 = vmatprep.subr.mxu0 0.0
        %551 = vmatpush1.msra.mxu0 0.0
        %552 = vmatprep.subr.mxu0 0.0
        %553 = vmatpush1.msra.mxu0 0.0
        %554 = vmatprep.subr.mxu0 0.0
        %555 = vmatpush1.msra.mxu0 0.0
        %556 = vmatprep.subr.mxu0 0.0
        %557 = vmatpush1.msra.mxu0 0.0
        %558 = vmatprep.subr.mxu0 0.0
        %559 = vmatpush1.msra.mxu0 0.0
        %560 = vmatprep.subr.mxu0 0.0
        %561 = vmatpush1.msra.mxu0 0.0
        %562 = vmatprep.subr.mxu0 0.0
        %563 = vmatpush1.msra.mxu0 0.0
        %564 = vmatprep.subr.mxu0 0.0
        %565 = vmatpush1.msra.mxu0 0.0
        %566 = vmatprep.subr.mxu0 0.0
        %567 = vmatpush1.msra.mxu0 0.0
        %568 = vmatprep.subr.mxu0 0.0
        %569 = vmatpush1.msra.mxu0 0.0
        %570 = vmatprep.subr.mxu0 0.0
        %571 = vmatpush1.msra.mxu0 0.0
        %572 = vmatprep.subr.mxu0 0.0
        %573 = vmatpush1.msra.mxu0 0.0
        %574 = vmatprep.subr.mxu0 0.0
        %575 = vmatpush1.msra.mxu0 0.0
        %576 = vmatprep.subr.mxu0 0.0
        %577 = vmatpush1.msra.mxu0 0.0
        %578 = vmatprep.subr.mxu0 0.0
        %579 = vmatpush1.msra.mxu0 0.0
        %580 = vmatprep.mubr.f32.mxu0 0.0
        %581 = vmatmul.mubr.f32.gmra.mrb[0].mxu0 %v443
        %v582 = vpop.f32.mrb[0].mxu0
        %v583 = vadd.f32 %v137, %v582
        %v584 = vpop.f32.mrb[0].mxu0
        %v585 = vadd.f32 %v138, %v584
        %586 = vdwg.mxu0
        %587 = vmatprep.subr.mxu0 %v140
        %588 = vmatpush1.msra.mxu0 %v139
        %589 = vmatprep.subr.mxu0 0.0
        %590 = vmatpush1.msra.mxu0 0.0
        %591 = vmatprep.subr.mxu0 0.0
        %592 = vmatpush1.msra.mxu0 0.0
        %593 = vmatprep.subr.mxu0 0.0
        %594 = vmatpush1.msra.mxu0 0.0
        %595 = vmatprep.subr.mxu0 0.0
        %596 = vmatpush1.msra.mxu0 0.0
        %597 = vmatprep.subr.mxu0 0.0
        %598 = vmatpush1.msra.mxu0 0.0
        %599 = vmatprep.subr.mxu0 0.0
        %600 = vmatpush1.msra.mxu0 0.0
        %601 = vmatprep.subr.mxu0 0.0
        %602 = vmatpush1.msra.mxu0 0.0
        %603 = vmatprep.subr.mxu0 0.0
        %604 = vmatpush1.msra.mxu0 0.0
        %605 = vmatprep.subr.mxu0 0.0
        %606 = vmatpush1.msra.mxu0 0.0
        %607 = vmatprep.subr.mxu0 0.0
        %608 = vmatpush1.msra.mxu0 0.0
        %609 = vmatprep.subr.mxu0 0.0
        %610 = vmatpush1.msra.mxu0 0.0
        %611 = vmatprep.subr.mxu0 0.0
        %612 = vmatpush1.msra.mxu0 0.0
        %613 = vmatprep.subr.mxu0 0.0
        %614 = vmatpush1.msra.mxu0 0.0
        %615 = vmatprep.subr.mxu0 0.0
        %616 = vmatpush1.msra.mxu0 0.0
        %617 = vmatprep.subr.mxu0 0.0
        %618 = vmatpush1.msra.mxu0 0.0
        %619 = vmatprep.subr.mxu0 0.0
        %620 = vmatpush1.msra.mxu0 0.0
        %621 = vmatprep.subr.mxu0 0.0
        %622 = vmatpush1.msra.mxu0 0.0
        %623 = vmatprep.subr.mxu0 0.0
        %624 = vmatpush1.msra.mxu0 0.0
        %625 = vmatprep.subr.mxu0 0.0
        %626 = vmatpush1.msra.mxu0 0.0
        %627 = vmatprep.subr.mxu0 0.0
        %628 = vmatpush1.msra.mxu0 0.0
        %629 = vmatprep.subr.mxu0 0.0
        %630 = vmatpush1.msra.mxu0 0.0
        %631 = vmatprep.subr.mxu0 0.0
        %632 = vmatpush1.msra.mxu0 0.0
        %633 = vmatprep.subr.mxu0 0.0
        %634 = vmatpush1.msra.mxu0 0.0
        %635 = vmatprep.subr.mxu0 0.0
        %636 = vmatpush1.msra.mxu0 0.0
        %637 = vmatprep.subr.mxu0 0.0
        %638 = vmatpush1.msra.mxu0 0.0
        %639 = vmatprep.subr.mxu0 0.0
        %640 = vmatpush1.msra.mxu0 0.0
        %641 = vmatprep.subr.mxu0 0.0
        %642 = vmatpush1.msra.mxu0 0.0
        %643 = vmatprep.subr.mxu0 0.0
        %644 = vmatpush1.msra.mxu0 0.0
        %645 = vmatprep.subr.mxu0 0.0
        %646 = vmatpush1.msra.mxu0 0.0
        %647 = vmatprep.subr.mxu0 0.0
        %648 = vmatpush1.msra.mxu0 0.0
        %649 = vmatprep.subr.mxu0 0.0
        %650 = vmatpush1.msra.mxu0 0.0
        %651 = vmatprep.mubr.f32.mxu0 0.0
        %652 = vmatmul.mubr.f32.gmra.mrb[0].mxu0 %v443
        %v653 = vpop.f32.mrb[0].mxu0
        %v654 = vadd.f32 %v139, %v653
        %v655 = vpop.f32.mrb[0].mxu0
        %v656 = vadd.f32 %v140, %v655
        %657 = vdwg.mxu0
        %658 = vmatprep.subr.mxu0 %v142
        %659 = vmatpush1.msra.mxu0 %v141
        %660 = vmatprep.subr.mxu0 0.0
        %661 = vmatpush1.msra.mxu0 0.0
        %662 = vmatprep.subr.mxu0 0.0
        %663 = vmatpush1.msra.mxu0 0.0
        %664 = vmatprep.subr.mxu0 0.0
        %665 = vmatpush1.msra.mxu0 0.0
        %666 = vmatprep.subr.mxu0 0.0
        %667 = vmatpush1.msra.mxu0 0.0
        %668 = vmatprep.subr.mxu0 0.0
        %669 = vmatpush1.msra.mxu0 0.0
        %670 = vmatprep.subr.mxu0 0.0
        %671 = vmatpush1.msra.mxu0 0.0
        %672 = vmatprep.subr.mxu0 0.0
        %673 = vmatpush1.msra.mxu0 0.0
        %674 = vmatprep.subr.mxu0 0.0
        %675 = vmatpush1.msra.mxu0 0.0
        %676 = vmatprep.subr.mxu0 0.0
        %677 = vmatpush1.msra.mxu0 0.0
        %678 = vmatprep.subr.mxu0 0.0
        %679 = vmatpush1.msra.mxu0 0.0
        %680 = vmatprep.subr.mxu0 0.0
        %681 = vmatpush1.msra.mxu0 0.0
        %682 = vmatprep.subr.mxu0 0.0
        %683 = vmatpush1.msra.mxu0 0.0
        %684 = vmatprep.subr.mxu0 0.0
        %685 = vmatpush1.msra.mxu0 0.0
        %686 = vmatprep.subr.mxu0 0.0
        %687 = vmatpush1.msra.mxu0 0.0
        %688 = vmatprep.subr.mxu0 0.0
        %689 = vmatpush1.msra.mxu0 0.0
        %690 = vmatprep.subr.mxu0 0.0
        %691 = vmatpush1.msra.mxu0 0.0
        %692 = vmatprep.subr.mxu0 0.0
        %693 = vmatpush1.msra.mxu0 0.0
        %694 = vmatprep.subr.mxu0 0.0
        %695 = vmatpush1.msra.mxu0 0.0
        %696 = vmatprep.subr.mxu0 0.0
        %697 = vmatpush1.msra.mxu0 0.0
        %698 = vmatprep.subr.mxu0 0.0
        %699 = vmatpush1.msra.mxu0 0.0
        %700 = vmatprep.subr.mxu0 0.0
        %701 = vmatpush1.msra.mxu0 0.0
        %702 = vmatprep.subr.mxu0 0.0
        %703 = vmatpush1.msra.mxu0 0.0
        %704 = vmatprep.subr.mxu0 0.0
        %705 = vmatpush1.msra.mxu0 0.0
        %706 = vmatprep.subr.mxu0 0.0
        %707 = vmatpush1.msra.mxu0 0.0
        %708 = vmatprep.subr.mxu0 0.0
        %709 = vmatpush1.msra.mxu0 0.0
        %710 = vmatprep.subr.mxu0 0.0
        %711 = vmatpush1.msra.mxu0 0.0
        %712 = vmatprep.subr.mxu0 0.0
        %713 = vmatpush1.msra.mxu0 0.0
        %714 = vmatprep.subr.mxu0 0.0
        %715 = vmatpush1.msra.mxu0 0.0
        %716 = vmatprep.subr.mxu0 0.0
        %717 = vmatpush1.msra.mxu0 0.0
        %718 = vmatprep.subr.mxu0 0.0
        %719 = vmatpush1.msra.mxu0 0.0
        %720 = vmatprep.subr.mxu0 0.0
        %721 = vmatpush1.msra.mxu0 0.0
        %722 = vmatprep.mubr.f32.mxu0 0.0
        %723 = vmatmul.mubr.f32.gmra.mrb[0].mxu0 %v443
        %v724 = vpop.f32.mrb[0].mxu0
        %v725 = vadd.f32 %v141, %v724
        %v726 = vpop.f32.mrb[0].mxu0
        %v727 = vadd.f32 %v142, %v726
        %728 = vdwg.mxu0
        %729 = vst [vmem:[%s134] sm:$0xff] %v512
        %730 = vst [vmem:[%s134 + $0x8] sm:$0xff] %v514
        %731 = vst [vmem:[%s134 + $0x10] sm:$0xff] %v583
        %732 = vst [vmem:[%s134 + $0x18] sm:$0xff] %v585
        %733 = vst [vmem:[%s134 + $0x20] sm:$0xff] %v654
        %734 = vst [vmem:[%s134 + $0x28] sm:$0xff] %v656
        %735 = vst [vmem:[%s134 + $0x30] sm:$0xff] %v725
        %736 = vst [vmem:[%s134 + $0x38] sm:$0xff] %v727
        %s737 = sand.u32 %s52, 1
        %s738 = scalar_lea.sflag [#allocation4], %s737
        %s739 = sand.u32 %s52, 1
        %s740 = smul.addr %s739, 64
        %s741 = scalar_lea.vmem [#allocation5], %s740
        // Predicated region
        $region29: #{tpu_custom_call.1} parent=23 // pred_check
          %p742 = pneg %p62
        $region30: #{tpu_custom_call.1} parent=23 // pred_check_branch
          %744 = sbr.rel (%p742) target = $region32
        $region31: #{tpu_custom_call.1} parent=23 // pred_region
          %s746 = ssub.s32 1024, 1024
          %747 = vsyncadd %s738, %s746
          %s748 = smul.addr %s18, 8
          %s749 = smul.addr %s748, 128
          %s750 = scalar_lea.hbm %s1, %s749
          %s751 = sshll.u32 %s741, 4
          %s752 = int_to_ptr.vmem [resolvable:$true] %s751
          %757 = dma.vmem_to_hbm [thread:$0]  %s752, 1024, %s750, %s738, 256, 256, 16
        $region32: #{tpu_custom_call.1} parent=23 // pred_fallthru
          _
      $region24: #{tpu_custom_call.1} parent=5 // pred_fallthru
        _
      %p758 = scmp.le.s32.totalorder 2, %s13
      // Predicated region
      $region33: #{tpu_custom_call.1} parent=5 // pred_check
        %p759 = pneg %p758
      $region34: #{tpu_custom_call.1} parent=5 // pred_check_branch
        %761 = sbr.rel (%p759) target = $region36
      $region35: #{tpu_custom_call.1} parent=5 // pred_region
        %s762 = ssub.s32 %s13, 2
        // Predicated region
        $region37: #{tpu_custom_call.1} parent=35 // pred_check
          %p763 = pneg %p68
        $region38: #{tpu_custom_call.1} parent=35 // pred_check_branch
          %765 = sbr.rel (%p763) target = $region40
        $region39: #{tpu_custom_call.1} parent=35 // pred_region
          %s766 = sand.u32 %s53, 1
          %s767 = scalar_lea.sflag [#allocation4], %s766
          %s768 = sand.u32 %s53, 1
          %s769 = smul.addr %s768, 64
          %s770 = scalar_lea.vmem [#allocation5], %s769
          %771 = dma.done %s767, 1024
        $region40: #{tpu_custom_call.1} parent=35 // pred_fallthru
          _
      $region36: #{tpu_custom_call.1} parent=5 // pred_fallthru
        _
    $region6: #{tpu_custom_call.1} parent=1 // loop_footer
      %s17 = sadd.s32 1, %s13
    $region7: #{tpu_custom_call.1} parent=1 // loop_footer_branch
      %12 = sbr.rel target = $region3
    $region8: #{tpu_custom_call.1} parent=1 // loop_exit
      _
    %772 = vsyncpa [#allocation3], 1
    %s773 = scalar_lea.sflag [#allocation3], 1
    %774 = vsyncpa %s773, 1
    %775 = vsyncpa [#allocation4], 1
    %s776 = scalar_lea.sflag [#allocation4], 1
    %777 = vsyncpa %s776, 1

</llo_original>
